<compile_context>
chip_gen: v5e
topology: v5e:2x2
jax: 0.10.0
libtpu: 0.0.40
codegen_flags: <defaults>
</compile_context>

<pallas_src>
import jax
import jax.numpy as jnp
from jax import lax
from jax.experimental import pallas as pl
from jax.experimental.pallas import tpu as pltpu


# ---------------------------------------------------------------------------
# Kernels
# ---------------------------------------------------------------------------
def _stacked_bn_train_kernel(eps_ref, x_ref, w_ref, b_ref,
                             o_ref, mean_ref, var_ref):
    # eps_ref : SMEM (L,) f32 (scalar prefetch)
    # x_ref   : VMEM (1, B, TF)
    # w_ref/b_ref : VMEM (1, 1, TF)
    # o_ref   : VMEM (1, B, TF)
    # mean_ref/var_ref : VMEM (1, 1, TF)  (batch mean / unbiased batch var)
    l = pl.program_id(0)
    x = x_ref[0].astype(jnp.float32)                       # (B, TF)
    nb = x.shape[0]

    mean = jnp.mean(x, axis=0, keepdims=True)              # (1, TF)
    centered = x - mean
    var = jnp.mean(centered * centered, axis=0, keepdims=True)  # biased var

    inv = lax.rsqrt(var + eps_ref[l])                      # (1, TF)
    y = centered * (inv * w_ref[0]) + b_ref[0]             # (B, TF)

    o_ref[0] = y.astype(o_ref.dtype)
    mean_ref[0] = mean
    unbias = jnp.float32(nb / (nb - 1)) if nb > 1 else jnp.float32(1.0)
    var_ref[0] = var * unbias                              # unbiased, for EMA


def _stacked_bn_eval_kernel(eps_ref, x_ref, rm_ref, rv_ref, w_ref, b_ref,
                            o_ref):
    l = pl.program_id(0)
    x = x_ref[0].astype(jnp.float32)                       # (B, TF)
    inv = lax.rsqrt(rv_ref[0] + eps_ref[l])                # (1, TF)
    y = (x - rm_ref[0]) * (inv * w_ref[0]) + b_ref[0]
    o_ref[0] = y.astype(o_ref.dtype)


# ---------------------------------------------------------------------------
# Wrapper
# ---------------------------------------------------------------------------
def _pick_tile_f(F):
    # Lane-aligned feature tile; full F when it is not a multiple of 128.
    if F % 128 != 0:
        return F
    for t in (512, 256, 128):
        if F % t == 0:
            return t
    return F


def stacked_batch_norm(x, running_mean, running_var, weight, bias,
                       use_batch_stats, momentum, eps):
    """x: [L, B, F]; params/buffers: [L, 1, F] (or None); momentum/eps: [L].

    Returns (output, new_running_mean, new_running_var).
    """
    L, B, F = x.shape
    eps = jnp.asarray(eps, jnp.float32).reshape(L)

    weight = (jnp.ones((L, 1, F), jnp.float32) if weight is None
              else jnp.asarray(weight, jnp.float32).reshape(L, 1, F))
    bias = (jnp.zeros((L, 1, F), jnp.float32) if bias is None
            else jnp.asarray(bias, jnp.float32).reshape(L, 1, F))

    tile_f = _pick_tile_f(F)
    grid = (L, F // tile_f)

    # index_maps receive the scalar-prefetch ref (eps) as a trailing arg.
    x_spec = pl.BlockSpec((1, B, tile_f), lambda l, f, eps: (l, 0, f))
    p_spec = pl.BlockSpec((1, 1, tile_f), lambda l, f, eps: (l, 0, f))

    cparams = pltpu.CompilerParams(
        dimension_semantics=("parallel", "parallel"))

    if use_batch_stats:
        # TODO(synk): batch axis is kept fully resident per block; for batch
        # sizes too large for VMEM a two-pass / Welford grid reduction over B
        # would be needed.
        grid_spec = pltpu.PrefetchScalarGridSpec(
            num_scalar_prefetch=1,
            grid=grid,
            in_specs=[x_spec, p_spec, p_spec],
            out_specs=[x_spec, p_spec, p_spec],
        )
        out, bmean, bvar_unbiased = pl.pallas_call(
            _stacked_bn_train_kernel,
            out_shape=(
                jax.ShapeDtypeStruct((L, B, F), x.dtype),
                jax.ShapeDtypeStruct((L, 1, F), jnp.float32),
                jax.ShapeDtypeStruct((L, 1, F), jnp.float32),
            ),
            grid_spec=grid_spec,
            compiler_params=cparams,
        )(eps, x, weight, bias)

        if (running_mean is not None and running_var is not None
                and momentum is not None):
            # Tiny [L,1,F] EMA update; done in plain jnp (not the hot path).
            # TODO(synk): num_batches_tracked += 1 is module-state bookkeeping
            # handled by the caller.
            m = jnp.asarray(momentum, jnp.float32).reshape(L, 1, 1)
            rm = jnp.asarray(running_mean, jnp.float32).reshape(L, 1, F)
            rv = jnp.asarray(running_var, jnp.float32).reshape(L, 1, F)
            new_rm = (1.0 - m) * rm + m * bmean
            new_rv = (1.0 - m) * rv + m * bvar_unbiased
        else:
            new_rm, new_rv = None, None
        return out, new_rm, new_rv

    # Eval path: use running statistics (pure elementwise).
    grid_spec = pltpu.PrefetchScalarGridSpec(
        num_scalar_prefetch=1,
        grid=grid,
        in_specs=[x_spec, p_spec, p_spec, p_spec, p_spec],
        out_specs=x_spec,
    )
    out = pl.pallas_call(
        _stacked_bn_eval_kernel,
        out_shape=jax.ShapeDtypeStruct((L, B, F), x.dtype),
        grid_spec=grid_spec,
        compiler_params=cparams,
    )(eps, x,
      jnp.asarray(running_mean, jnp.float32).reshape(L, 1, F),
      jnp.asarray(running_var, jnp.float32).reshape(L, 1, F),
      weight, bias)
    return out, running_mean, running_var


# ---------------------------------------------------------------------------
# Self-test
# ---------------------------------------------------------------------------
if __name__ == "__main__":
    # num_nets stacked BatchNorm1d layers over [batch, num_features] inputs.
    L, B, F = 4, 8, 32

    key = jax.random.PRNGKey(0)
    kx, kw, kb = jax.random.split(key, 3)
    x = jax.random.normal(kx, (L, B, F), dtype=jnp.float32)
    weight = jax.random.uniform(kw, (L, 1, F), dtype=jnp.float32)
    bias = 0.1 * jax.random.normal(kb, (L, 1, F), dtype=jnp.float32)

    running_mean = jnp.zeros((L, 1, F), jnp.float32)
    running_var = jnp.ones((L, 1, F), jnp.float32)
    eps = jnp.array([1e-5, 1e-5, 1e-4, 1e-3], jnp.float32)
    momentum = jnp.full((L,), 0.1, jnp.float32)

    # ---- training path (batch statistics + running-stat update) ----
    out_t, new_rm, new_rv = stacked_batch_norm(
        x, running_mean, running_var, weight, bias,
        use_batch_stats=True, momentum=momentum, eps=eps)
    out_t = jax.block_until_ready(out_t)

    x32 = x.astype(jnp.float32)
    bm = x32.mean(axis=1, keepdims=True)                       # (L,1,F)
    bv = ((x32 - bm) ** 2).mean(axis=1, keepdims=True)         # biased
    ref_t = (x32 - bm) / jnp.sqrt(bv + eps[:, None, None]) * weight + bias
    assert out_t.shape == x.shape and out_t.dtype == x.dtype
    assert jnp.allclose(out_t, ref_t, atol=1e-4, rtol=1e-4)

    bv_unbiased = bv * (B / (B - 1))
    ref_rm = 0.9 * running_mean + 0.1 * bm
    ref_rv = 0.9 * running_var + 0.1 * bv_unbiased
    assert jnp.allclose(new_rm, ref_rm, atol=1e-5, rtol=1e-5)
    assert jnp.allclose(new_rv, ref_rv, atol=1e-5, rtol=1e-5)

    # ---- eval path (running statistics) ----
    out_e, _, _ = stacked_batch_norm(
        x, new_rm, new_rv, weight, bias,
        use_batch_stats=False, momentum=momentum, eps=eps)
    out_e = jax.block_until_ready(out_e)

    ref_e = (x32 - new_rm) / jnp.sqrt(new_rv + eps[:, None, None]) * weight + bias
    assert jnp.allclose(out_e, ref_e, atol=1e-4, rtol=1e-4)

    print("KERNEL_OK")
</pallas_src>

<mosaic_0001>
module attributes {stable_mosaic.version = 11 : i64} {
  func.func @_stacked_bn_train_kernel(%arg0: i32, %arg1: i32, %arg2: memref<4xf32, #tpu.memory_space<smem>>, %arg3: memref<1x8x32xf32, #tpu.memory_space<vmem>>, %arg4: memref<1x1x32xf32, #tpu.memory_space<vmem>>, %arg5: memref<1x1x32xf32, #tpu.memory_space<vmem>>, %arg6: memref<1x8x32xf32, #tpu.memory_space<vmem>>, %arg7: memref<1x1x32xf32, #tpu.memory_space<vmem>>, %arg8: memref<1x1x32xf32, #tpu.memory_space<vmem>>) attributes {dimension_semantics = [#tpu.dimension_semantics<parallel>, #tpu.dimension_semantics<parallel>], iteration_bounds = array<i64: 4, 1>, scalar_prefetch = 1 : i64, scratch_operands = 0 : i64, tpu.core_type = #tpu.core_type<tc>, window_params = [{transform_indices = @transform_0, window_bounds = array<i64: 1, 8, 32>}, {transform_indices = @transform_1, window_bounds = array<i64: 1, 1, 32>}, {transform_indices = @transform_2, window_bounds = array<i64: 1, 1, 32>}, {transform_indices = @transform_3, window_bounds = array<i64: 1, 8, 32>}, {transform_indices = @transform_4, window_bounds = array<i64: 1, 1, 32>}, {transform_indices = @transform_5, window_bounds = array<i64: 1, 1, 32>}]} {
    %c0 = arith.constant 0 : index
    %c0_0 = arith.constant 0 : index
    %c0_1 = arith.constant 0 : index
    %0 = vector.load %arg3[%c0, %c0_0, %c0_1] : memref<1x8x32xf32, #tpu.memory_space<vmem>>, vector<1x8x32xf32>
    %1 = vector.shape_cast %0 : vector<1x8x32xf32> to vector<8x32xf32>
    %cst = arith.constant dense<0.000000e+00> : vector<32xf32>
    %2 = vector.multi_reduction <add>, %1, %cst [0] : vector<8x32xf32> to vector<32xf32>
    %3 = vector.shape_cast %2 : vector<32xf32> to vector<1x32xf32>
    %cst_2 = arith.constant 8.000000e+00 : f32
    %4 = vector.broadcast %cst_2 : f32 to vector<1x32xf32>
    %5 = arith.divf %3, %4 : vector<1x32xf32>
    %6 = vector.broadcast %5 : vector<1x32xf32> to vector<8x32xf32>
    %7 = arith.subf %1, %6 : vector<8x32xf32>
    %8 = arith.mulf %7, %7 : vector<8x32xf32>
    %cst_3 = arith.constant dense<0.000000e+00> : vector<32xf32>
    %9 = vector.multi_reduction <add>, %8, %cst_3 [0] : vector<8x32xf32> to vector<32xf32>
    %10 = vector.shape_cast %9 : vector<32xf32> to vector<1x32xf32>
    %cst_4 = arith.constant 8.000000e+00 : f32
    %11 = vector.broadcast %cst_4 : f32 to vector<1x32xf32>
    %12 = arith.divf %10, %11 : vector<1x32xf32>
    %13 = arith.index_cast %arg0 : i32 to index
    %14 = memref.load %arg2[%13] : memref<4xf32, #tpu.memory_space<smem>>
    %15 = vector.broadcast %14 : f32 to vector<1x32xf32>
    %16 = arith.addf %12, %15 : vector<1x32xf32>
    %17 = math.rsqrt %16 : vector<1x32xf32>
    %c0_5 = arith.constant 0 : index
    %c0_6 = arith.constant 0 : index
    %c0_7 = arith.constant 0 : index
    %18 = vector.load %arg4[%c0_5, %c0_6, %c0_7] : memref<1x1x32xf32, #tpu.memory_space<vmem>>, vector<1x1x32xf32>
    %19 = vector.shape_cast %18 : vector<1x1x32xf32> to vector<1x32xf32>
    %20 = arith.mulf %17, %19 : vector<1x32xf32>
    %21 = vector.broadcast %20 : vector<1x32xf32> to vector<8x32xf32>
    %22 = arith.mulf %7, %21 : vector<8x32xf32>
    %c0_8 = arith.constant 0 : index
    %c0_9 = arith.constant 0 : index
    %c0_10 = arith.constant 0 : index
    %23 = vector.load %arg5[%c0_8, %c0_9, %c0_10] : memref<1x1x32xf32, #tpu.memory_space<vmem>>, vector<1x1x32xf32>
    %24 = vector.shape_cast %23 : vector<1x1x32xf32> to vector<1x32xf32>
    %25 = vector.broadcast %24 : vector<1x32xf32> to vector<8x32xf32>
    %26 = arith.addf %22, %25 : vector<8x32xf32>
    %c0_11 = arith.constant 0 : index
    %c0_12 = arith.constant 0 : index
    %c0_13 = arith.constant 0 : index
    %27 = vector.load %arg6[%c0_11, %c0_12, %c0_13] : memref<1x8x32xf32, #tpu.memory_space<vmem>>, vector<1x8x32xf32>
    %28 = vector.shape_cast %27 : vector<1x8x32xf32> to vector<8x32xf32>
    %29 = vector.shape_cast %26 : vector<8x32xf32> to vector<1x8x32xf32>
    tpu.vector_store %arg6[%c0_11, %c0_12, %c0_13], %29 {strides = array<i32>} : memref<1x8x32xf32, #tpu.memory_space<vmem>>, vector<1x8x32xf32>,
    %c0_14 = arith.constant 0 : index
    %c0_15 = arith.constant 0 : index
    %c0_16 = arith.constant 0 : index
    %30 = vector.load %arg7[%c0_14, %c0_15, %c0_16] : memref<1x1x32xf32, #tpu.memory_space<vmem>>, vector<1x1x32xf32>
    %31 = vector.shape_cast %30 : vector<1x1x32xf32> to vector<1x32xf32>
    %32 = vector.shape_cast %5 : vector<1x32xf32> to vector<1x1x32xf32>
    tpu.vector_store %arg7[%c0_14, %c0_15, %c0_16], %32 {strides = array<i32>} : memref<1x1x32xf32, #tpu.memory_space<vmem>>, vector<1x1x32xf32>,
    %cst_17 = arith.constant 1.14285719 : f32
    %33 = vector.broadcast %cst_17 : f32 to vector<1x32xf32>
    %34 = arith.mulf %12, %33 : vector<1x32xf32>
    %c0_18 = arith.constant 0 : index
    %c0_19 = arith.constant 0 : index
    %c0_20 = arith.constant 0 : index
    %35 = vector.load %arg8[%c0_18, %c0_19, %c0_20] : memref<1x1x32xf32, #tpu.memory_space<vmem>>, vector<1x1x32xf32>
    %36 = vector.shape_cast %35 : vector<1x1x32xf32> to vector<1x32xf32>
    %37 = vector.shape_cast %34 : vector<1x32xf32> to vector<1x1x32xf32>
    tpu.vector_store %arg8[%c0_18, %c0_19, %c0_20], %37 {strides = array<i32>} : memref<1x1x32xf32, #tpu.memory_space<vmem>>, vector<1x1x32xf32>,
    return
  }
  func.func @transform_0(%arg0: i32, %arg1: i32, %arg2: memref<4xf32, #tpu.memory_space<smem>>) -> (i32, i32, i32) {
    %c0_i32 = arith.constant 0 : i32
    %c0_i32_0 = arith.constant 0 : i32
    return %arg0, %c0_i32, %arg1 : i32, i32, i32
  }
  func.func @transform_1(%arg0: i32, %arg1: i32, %arg2: memref<4xf32, #tpu.memory_space<smem>>) -> (i32, i32, i32) {
    %c0_i32 = arith.constant 0 : i32
    %c0_i32_0 = arith.constant 0 : i32
    return %arg0, %c0_i32, %arg1 : i32, i32, i32
  }
  func.func @transform_2(%arg0: i32, %arg1: i32, %arg2: memref<4xf32, #tpu.memory_space<smem>>) -> (i32, i32, i32) {
    %c0_i32 = arith.constant 0 : i32
    %c0_i32_0 = arith.constant 0 : i32
    return %arg0, %c0_i32, %arg1 : i32, i32, i32
  }
  func.func @transform_3(%arg0: i32, %arg1: i32, %arg2: memref<4xf32, #tpu.memory_space<smem>>) -> (i32, i32, i32) {
    %c0_i32 = arith.constant 0 : i32
    %c0_i32_0 = arith.constant 0 : i32
    return %arg0, %c0_i32, %arg1 : i32, i32, i32
  }
  func.func @transform_4(%arg0: i32, %arg1: i32, %arg2: memref<4xf32, #tpu.memory_space<smem>>) -> (i32, i32, i32) {
    %c0_i32 = arith.constant 0 : i32
    %c0_i32_0 = arith.constant 0 : i32
    return %arg0, %c0_i32, %arg1 : i32, i32, i32
  }
  func.func @transform_5(%arg0: i32, %arg1: i32, %arg2: memref<4xf32, #tpu.memory_space<smem>>) -> (i32, i32, i32) {
    %c0_i32 = arith.constant 0 : i32
    %c0_i32_0 = arith.constant 0 : i32
    return %arg0, %c0_i32, %arg1 : i32, i32, i32
  }
}

</mosaic_0001>

<llo_original>
// kernel: tpu_custom_call.1
$region0: #{tpu_custom_call.1}
  #allocation0 [shape = 'u32[]', space=smem, size = 0x4, offset = 0x4, fixed_abs, tag = 'smem constant byte address 0x4 - core index']
  #allocation1 [shape = 'u32[72,128]{1,0:T(1,128)}', space=vmem, size = 0x9000, scoped, tag = 'internal scratch']
  #allocation2 [shape = 's32[1]{0}', space=sflag, size = 0x4, scoped, tag = 'scoped memory for tpu_custom_call.1']
  #allocation3 [shape = 'u8[512]{0}', space=smem, size = 0x200, scoped, tag = 'prefetched SMEM operand 0']
  %s0 = inlined_call_operand.hbm [shape: f32[4], index: 0, kind: input, shape index: {}]
  %s1 = inlined_call_operand.hbm [shape: f32[4,8,32], index: 1, kind: input, shape index: {}]
  %s2 = inlined_call_operand.hbm [shape: f32[4,1,32], index: 2, kind: input, shape index: {}]
  %s3 = inlined_call_operand.hbm [shape: f32[4,1,32], index: 3, kind: input, shape index: {}]
  %s4 = inlined_call_operand.hbm [shape: f32[4,8,32], index: 4, kind: output, shape index: {0}]
  %s5 = inlined_call_operand.hbm [shape: f32[4,1,32], index: 5, kind: output, shape index: {1}]
  %s6 = inlined_call_operand.hbm [shape: f32[4,1,32], index: 6, kind: output, shape index: {2}]
  %7 = xla_tuple %s4, %s5, %s6
  %s8 = sld [smem:[#allocation0]]
  $region73: #{tpu_custom_call.1} parent=0
    _
  %s10 = ssub.s32 1, %s8
  %s11 = scalar_select 0, %s10, %s8
  %s13 = sshll.u32 %s0, 4
  %s14 = int_to_ptr.hbm [resolvable:$true] %s13
  %16 = dma.hbm_to_smem %s14, 16, [#allocation3], [#allocation2]
  %18 = dma.done [#allocation2], 16
  %19 = sfence
  $region1: #{tpu_custom_call.1} parent=0
    #allocation4 [shape = 'u8[8192]{0}', space=vmem, size = 0x2000, scoped, tag = 'input window, operand 1']
    #allocation5 [shape = 's32[2]{0}', space=sflag, size = 0x8, scoped, tag = 'scoped memory for tpu_custom_call.1']
    #allocation6 [shape = 's32[2]{0}', space=sflag, size = 0x8, scoped, tag = 'scoped memory for tpu_custom_call.1']
    #allocation7 [shape = 'u8[1024]{0}', space=vmem, size = 0x400, scoped, tag = 'input window, operand 2']
    #allocation8 [shape = 's32[2]{0}', space=sflag, size = 0x8, scoped, tag = 'scoped memory for tpu_custom_call.1']
    #allocation9 [shape = 'u8[1024]{0}', space=vmem, size = 0x400, scoped, tag = 'input window, operand 3']
    #allocation10 [shape = 'u8[8192]{0}', space=vmem, size = 0x2000, scoped, tag = 'output window, operand 0']
    #allocation11 [shape = 'u8[1024]{0}', space=vmem, size = 0x400, scoped, tag = 'output window, operand 1']
    #allocation12 [shape = 's32[2]{0}', space=sflag, size = 0x8, scoped, tag = 'scoped memory for tpu_custom_call.1']
    #allocation13 [shape = 'u8[1024]{0}', space=vmem, size = 0x400, scoped, tag = 'output window, operand 2']
    %20 = vsyncpa [#allocation5], 0
    %s21 = scalar_lea.sflag [#allocation5], 1
    %22 = vsyncpa %s21, 0
    %23 = vsyncpa [#allocation8], 0
    %s24 = scalar_lea.sflag [#allocation8], 1
    %25 = vsyncpa %s24, 0
    %26 = vsyncpa [#allocation6], 0
    %s27 = scalar_lea.sflag [#allocation6], 1
    %28 = vsyncpa %s27, 0
    %29 = vsyncpa [#allocation12], 0
    %s30 = scalar_lea.sflag [#allocation12], 1
    %31 = vsyncpa %s30, 0
    loop: start=0, step=1, limit=6
    $region2: #{tpu_custom_call.1} parent=1 // loop_pre_header
      _
    $region3: #{tpu_custom_call.1} parent=1 // loop_header
      %s33 = sphi 0, %s37
      %p34 = scmp.ge.s32.totalorder %s33, 6
      %s40 = sphi 0, %s52
      %s41 = sphi 0, %s48
      %s42 = sphi 0, %s40
      %s43 = sphi 0, %s41
      %s44 = sphi 0, %s42
      %s45 = sphi 0, %s43
      %s57 = sphi 0, %s59
      %s60 = sphi 0, %s57
      %s61 = sphi 0, %s60
      %s77 = sphi 0, %s61
      %s85 = sphi 0, %s87
      %s88 = sphi 0, %s85
      %s89 = sphi 0, %s88
      %s105 = sphi 0, %s89
      %s113 = sphi 0, %s115
      %s116 = sphi 0, %s113
      %s117 = sphi 0, %s116
      %s133 = sphi 0, %s117
      %s141 = sphi 0, %s143
      %s144 = sphi 0, %s141
      %s145 = sphi 0, %s144
      %s161 = sphi 0, %s145
      %s169 = sphi 0, %s171
      %s172 = sphi 0, %s169
      %s173 = sphi 0, %s172
      %s189 = sphi 0, %s173
      %s197 = sphi 0, %s199
      %s200 = sphi 0, %s197
      %s201 = sphi 0, %s200
      %s217 = sphi 0, %s201
    $region4: #{tpu_custom_call.1} parent=1 // loop_header_branch
      %36 = sbr.rel (%p34) target = $region8
    $region5: #{tpu_custom_call.1} parent=1 // loop_body
      %s38 = ssub.s32 %s33, 1
      %s39 = ssub.s32 %s33, 2
      %s46 = sadd.s32 1, %s41
      %p47 = scmp.ge.s32.totalorder %s46, 1
      %s48 = scalar_select %p47, 0, %s46
      %s49 = sadd.s32 1, %s40
      %s50 = scalar_select %p47, %s49, %s40
      %p51 = scmp.ge.s32.totalorder %s50, 4
      %s52 = scalar_select %p51, 0, %s50
      %s53 = ssub.s32 %s40, %s52
      %s54 = ssub.s32 %s41, %s48
      %s55 = sor.u32 %s53, %s54
      %p56 = scmp.eq.s32.totalorder %s55, 0
      %s58 = sadd.s32 %s57, 1
      %s59 = scalar_select %p56, %s57, %s58
      %p62 = pneg %p56
      %p63 = scmp.eq.s32.totalorder %s33, 3
      %p64 = por %p62, %p63
      %p65 = scmp.ne.s32.totalorder %s57, %s60
      %p66 = scmp.eq.s32.totalorder %s33, 0
      %p67 = por %p65, %p66
      %p68 = scmp.ne.s32.totalorder %s57, %s60
      %p69 = scmp.eq.s32.totalorder %s38, 3
      %p70 = por %p68, %p69
      %p71 = scmp.ne.s32.totalorder %s60, %s61
      %p72 = scmp.eq.s32.totalorder %s38, 0
      %p73 = por %p71, %p72
      %p74 = scmp.ne.s32.totalorder %s60, %s61
      %p75 = scmp.eq.s32.totalorder %s39, 3
      %p76 = por %p74, %p75
      %p78 = scmp.ne.s32.totalorder %s61, %s77
      %p79 = scmp.eq.s32.totalorder %s39, 0
      %p80 = por %p78, %p79
      %s81 = ssub.s32 %s40, %s52
      %s82 = ssub.s32 %s41, %s48
      %s83 = sor.u32 %s81, %s82
      %p84 = scmp.eq.s32.totalorder %s83, 0
      %s86 = sadd.s32 %s85, 1
      %s87 = scalar_select %p84, %s85, %s86
      %p90 = pneg %p84
      %p91 = scmp.eq.s32.totalorder %s33, 3
      %p92 = por %p90, %p91
      %p93 = scmp.ne.s32.totalorder %s85, %s88
      %p94 = scmp.eq.s32.totalorder %s33, 0
      %p95 = por %p93, %p94
      %p96 = scmp.ne.s32.totalorder %s85, %s88
      %p97 = scmp.eq.s32.totalorder %s38, 3
      %p98 = por %p96, %p97
      %p99 = scmp.ne.s32.totalorder %s88, %s89
      %p100 = scmp.eq.s32.totalorder %s38, 0
      %p101 = por %p99, %p100
      %p102 = scmp.ne.s32.totalorder %s88, %s89
      %p103 = scmp.eq.s32.totalorder %s39, 3
      %p104 = por %p102, %p103
      %p106 = scmp.ne.s32.totalorder %s89, %s105
      %p107 = scmp.eq.s32.totalorder %s39, 0
      %p108 = por %p106, %p107
      %s109 = ssub.s32 %s40, %s52
      %s110 = ssub.s32 %s41, %s48
      %s111 = sor.u32 %s109, %s110
      %p112 = scmp.eq.s32.totalorder %s111, 0
      %s114 = sadd.s32 %s113, 1
      %s115 = scalar_select %p112, %s113, %s114
      %p118 = pneg %p112
      %p119 = scmp.eq.s32.totalorder %s33, 3
      %p120 = por %p118, %p119
      %p121 = scmp.ne.s32.totalorder %s113, %s116
      %p122 = scmp.eq.s32.totalorder %s33, 0
      %p123 = por %p121, %p122
      %p124 = scmp.ne.s32.totalorder %s113, %s116
      %p125 = scmp.eq.s32.totalorder %s38, 3
      %p126 = por %p124, %p125
      %p127 = scmp.ne.s32.totalorder %s116, %s117
      %p128 = scmp.eq.s32.totalorder %s38, 0
      %p129 = por %p127, %p128
      %p130 = scmp.ne.s32.totalorder %s116, %s117
      %p131 = scmp.eq.s32.totalorder %s39, 3
      %p132 = por %p130, %p131
      %p134 = scmp.ne.s32.totalorder %s117, %s133
      %p135 = scmp.eq.s32.totalorder %s39, 0
      %p136 = por %p134, %p135
      %s137 = ssub.s32 %s40, %s52
      %s138 = ssub.s32 %s41, %s48
      %s139 = sor.u32 %s137, %s138
      %p140 = scmp.eq.s32.totalorder %s139, 0
      %s142 = sadd.s32 %s141, 1
      %s143 = scalar_select %p140, %s141, %s142
      %p146 = pneg %p140
      %p147 = scmp.eq.s32.totalorder %s33, 3
      %p148 = por %p146, %p147
      %p149 = scmp.ne.s32.totalorder %s141, %s144
      %p150 = scmp.eq.s32.totalorder %s33, 0
      %p151 = por %p149, %p150
      %p152 = scmp.ne.s32.totalorder %s141, %s144
      %p153 = scmp.eq.s32.totalorder %s38, 3
      %p154 = por %p152, %p153
      %p155 = scmp.ne.s32.totalorder %s144, %s145
      %p156 = scmp.eq.s32.totalorder %s38, 0
      %p157 = por %p155, %p156
      %p158 = scmp.ne.s32.totalorder %s144, %s145
      %p159 = scmp.eq.s32.totalorder %s39, 3
      %p160 = por %p158, %p159
      %p162 = scmp.ne.s32.totalorder %s145, %s161
      %p163 = scmp.eq.s32.totalorder %s39, 0
      %p164 = por %p162, %p163
      %s165 = ssub.s32 %s40, %s52
      %s166 = ssub.s32 %s41, %s48
      %s167 = sor.u32 %s165, %s166
      %p168 = scmp.eq.s32.totalorder %s167, 0
      %s170 = sadd.s32 %s169, 1
      %s171 = scalar_select %p168, %s169, %s170
      %p174 = pneg %p168
      %p175 = scmp.eq.s32.totalorder %s33, 3
      %p176 = por %p174, %p175
      %p177 = scmp.ne.s32.totalorder %s169, %s172
      %p178 = scmp.eq.s32.totalorder %s33, 0
      %p179 = por %p177, %p178
      %p180 = scmp.ne.s32.totalorder %s169, %s172
      %p181 = scmp.eq.s32.totalorder %s38, 3
      %p182 = por %p180, %p181
      %p183 = scmp.ne.s32.totalorder %s172, %s173
      %p184 = scmp.eq.s32.totalorder %s38, 0
      %p185 = por %p183, %p184
      %p186 = scmp.ne.s32.totalorder %s172, %s173
      %p187 = scmp.eq.s32.totalorder %s39, 3
      %p188 = por %p186, %p187
      %p190 = scmp.ne.s32.totalorder %s173, %s189
      %p191 = scmp.eq.s32.totalorder %s39, 0
      %p192 = por %p190, %p191
      %s193 = ssub.s32 %s40, %s52
      %s194 = ssub.s32 %s41, %s48
      %s195 = sor.u32 %s193, %s194
      %p196 = scmp.eq.s32.totalorder %s195, 0
      %s198 = sadd.s32 %s197, 1
      %s199 = scalar_select %p196, %s197, %s198
      %p202 = pneg %p196
      %p203 = scmp.eq.s32.totalorder %s33, 3
      %p204 = por %p202, %p203
      %p205 = scmp.ne.s32.totalorder %s197, %s200
      %p206 = scmp.eq.s32.totalorder %s33, 0
      %p207 = por %p205, %p206
      %p208 = scmp.ne.s32.totalorder %s197, %s200
      %p209 = scmp.eq.s32.totalorder %s38, 3
      %p210 = por %p208, %p209
      %p211 = scmp.ne.s32.totalorder %s200, %s201
      %p212 = scmp.eq.s32.totalorder %s38, 0
      %p213 = por %p211, %p212
      %p214 = scmp.ne.s32.totalorder %s200, %s201
      %p215 = scmp.eq.s32.totalorder %s39, 3
      %p216 = por %p214, %p215
      %p218 = scmp.ne.s32.totalorder %s201, %s217
      %p219 = scmp.eq.s32.totalorder %s39, 0
      %p220 = por %p218, %p219
      %p221 = scmp.le.s32.totalorder 1, %s33
      %p222 = scmp.lt.s32.totalorder %s33, 5
      %p223 = pnand %p221, %p222
      %p224 = pneg %p223
      // Predicated region
      $region9: #{tpu_custom_call.1} parent=5 // pred_check
        _
      $region10: #{tpu_custom_call.1} parent=5 // pred_check_branch
        %226 = sbr.rel (%p223) target = $region12
      $region11: #{tpu_custom_call.1} parent=5 // pred_region
        %s227 = ssub.s32 %s33, 1
      $region12: #{tpu_custom_call.1} parent=5 // pred_fallthru
        _
      %p228 = scmp.lt.s32.totalorder %s33, 4
      // Predicated region
      $region13: #{tpu_custom_call.1} parent=5 // pred_check
        %p229 = pneg %p228
      $region14: #{tpu_custom_call.1} parent=5 // pred_check_branch
        %231 = sbr.rel (%p229) target = $region16
      $region15: #{tpu_custom_call.1} parent=5 // pred_region
        // Predicated region
        $region17: #{tpu_custom_call.1} parent=15 // pred_check
          %p232 = pneg %p67
        $region18: #{tpu_custom_call.1} parent=15 // pred_check_branch
          %234 = sbr.rel (%p232) target = $region20
        $region19: #{tpu_custom_call.1} parent=15 // pred_region
          %s235 = sand.u32 %s57, 1
          %s236 = scalar_lea.sflag [#allocation5], %s235
          %s237 = sand.u32 %s57, 1
          %s238 = smul.addr %s237, 8
          %s239 = scalar_lea.vmem [#allocation4], %s238
          %241 = vsyncadd %s236, 0
          %s242 = sadd.s32 %s41, %s40
          %s243 = smul.addr %s242, 8
          %s244 = scalar_lea.hbm %s1, %s243
          %s246 = sshll.u32 %s244, 4
          %s247 = int_to_ptr.hbm [resolvable:$true] %s246
          %s248 = sshll.u32 %s239, 4
          %s249 = int_to_ptr.vmem [resolvable:$true] %s248
          %251 = dma.hbm_to_vmem [thread:$0]  %s247, 128, %s249, %s236
        $region20: #{tpu_custom_call.1} parent=15 // pred_fallthru
          _
        // Predicated region
        $region21: #{tpu_custom_call.1} parent=15 // pred_check
          %p252 = pneg %p95
        $region22: #{tpu_custom_call.1} parent=15 // pred_check_branch
          %254 = sbr.rel (%p252) target = $region24
        $region23: #{tpu_custom_call.1} parent=15 // pred_region
          %s255 = sand.u32 %s33, 1
          %s256 = scalar_lea.sflag [#allocation8], %s255
          %s257 = sand.u32 %s85, 1
          %s258 = scalar_lea.vmem [#allocation7], %s257
          %260 = vsyncadd %s256, 0
          %s261 = sadd.s32 %s41, %s40
          %s262 = scalar_lea.hbm %s2, %s261
          %s264 = sshll.u32 %s262, 4
          %s265 = int_to_ptr.hbm [resolvable:$true] %s264
          %s266 = sshll.u32 %s258, 4
          %s267 = int_to_ptr.vmem [resolvable:$true] %s266
          %269 = dma.hbm_to_vmem [thread:$0]  %s265, 16, %s267, %s256
        $region24: #{tpu_custom_call.1} parent=15 // pred_fallthru
          _
        // Predicated region
        $region25: #{tpu_custom_call.1} parent=15 // pred_check
          %p270 = pneg %p123
        $region26: #{tpu_custom_call.1} parent=15 // pred_check_branch
          %272 = sbr.rel (%p270) target = $region28
        $region27: #{tpu_custom_call.1} parent=15 // pred_region
          %s273 = sand.u32 %s33, 1
          %s274 = scalar_lea.sflag [#allocation8], %s273
          %s275 = sand.u32 %s113, 1
          %s276 = scalar_lea.vmem [#allocation9], %s275
          %278 = vsyncadd %s274, 0
          %s279 = sadd.s32 %s41, %s40
          %s280 = scalar_lea.hbm %s3, %s279
          %s282 = sshll.u32 %s280, 4
          %s283 = int_to_ptr.hbm [resolvable:$true] %s282
          %s284 = sshll.u32 %s276, 4
          %s285 = int_to_ptr.vmem [resolvable:$true] %s284
          %287 = dma.hbm_to_vmem [thread:$0]  %s283, 16, %s285, %s274
        $region28: #{tpu_custom_call.1} parent=15 // pred_fallthru
          _
      $region16: #{tpu_custom_call.1} parent=5 // pred_fallthru
        _
      %p288 = scmp.le.s32.totalorder 1, %s33
      %p289 = scmp.lt.s32.totalorder %s33, 5
      %p290 = pnand %p288, %p289
      %p291 = pneg %p290
      // Predicated region
      $region29: #{tpu_custom_call.1} parent=5 // pred_check
        _
      $region30: #{tpu_custom_call.1} parent=5 // pred_check_branch
        %293 = sbr.rel (%p290) target = $region32
      $region31: #{tpu_custom_call.1} parent=5 // pred_region
        %s294 = ssub.s32 %s33, 1
        %s295 = sand.u32 %s60, 1
        %s296 = scalar_lea.sflag [#allocation5], %s295
        %s297 = sand.u32 %s60, 1
        %s298 = smul.addr %s297, 8
        %s299 = scalar_lea.vmem [#allocation4], %s298
        // Predicated region
        $region33: #{tpu_custom_call.1} parent=31 // pred_check
          %p300 = pneg %p73
        $region34: #{tpu_custom_call.1} parent=31 // pred_check_branch
          %302 = sbr.rel (%p300) target = $region36
        $region35: #{tpu_custom_call.1} parent=31 // pred_region
          %304 = dma.done %s296, 128
        $region36: #{tpu_custom_call.1} parent=31 // pred_fallthru
          _
        %s305 = sand.u32 %s38, 1
        %s306 = scalar_lea.sflag [#allocation8], %s305
        %s307 = sand.u32 %s88, 1
        %s308 = scalar_lea.vmem [#allocation7], %s307
        // Predicated region
        $region37: #{tpu_custom_call.1} parent=31 // pred_check
          %p309 = pneg %p101
        $region38: #{tpu_custom_call.1} parent=31 // pred_check_branch
          %311 = sbr.rel (%p309) target = $region40
        $region39: #{tpu_custom_call.1} parent=31 // pred_region
          %313 = dma.done %s306, 16
        $region40: #{tpu_custom_call.1} parent=31 // pred_fallthru
          _
        %s314 = sand.u32 %s38, 1
        %s315 = scalar_lea.sflag [#allocation8], %s314
        %s316 = sand.u32 %s116, 1
        %s317 = scalar_lea.vmem [#allocation9], %s316
        // Predicated region
        $region41: #{tpu_custom_call.1} parent=31 // pred_check
          %p318 = pneg %p129
        $region42: #{tpu_custom_call.1} parent=31 // pred_check_branch
          %320 = sbr.rel (%p318) target = $region44
        $region43: #{tpu_custom_call.1} parent=31 // pred_region
          %322 = dma.done %s315, 16
        $region44: #{tpu_custom_call.1} parent=31 // pred_fallthru
          _
        %s323 = sand.u32 %s60, 1
        %s324 = scalar_lea.sflag [#allocation5], %s323
        %s325 = sand.u32 %s60, 1
        %s326 = smul.addr %s325, 8
        %s327 = scalar_lea.vmem [#allocation4], %s326
        %p328 = pneg %p73
        %p329 = pneg %p70
        %s330 = sand.u32 %s38, 1
        %s331 = scalar_lea.sflag [#allocation8], %s330
        %s332 = sand.u32 %s88, 1
        %s333 = scalar_lea.vmem [#allocation7], %s332
        %p334 = pneg %p101
        %p335 = pneg %p98
        %s336 = sand.u32 %s38, 1
        %s337 = scalar_lea.sflag [#allocation8], %s336
        %s338 = sand.u32 %s116, 1
        %s339 = scalar_lea.vmem [#allocation9], %s338
        %p340 = pneg %p129
        %p341 = pneg %p126
        %p342 = pneg %p157
        %p343 = pneg %p154
        %s344 = sand.u32 %s144, 1
        %s345 = scalar_lea.sflag [#allocation6], %s344
        %s346 = sand.u32 %s144, 1
        %s347 = smul.addr %s346, 8
        %s348 = scalar_lea.vmem [#allocation10], %s347
        %p349 = pneg %p185
        %p350 = pneg %p182
        %s351 = sand.u32 %s38, 1
        %s352 = scalar_lea.sflag [#allocation12], %s351
        %s353 = sand.u32 %s172, 1
        %s354 = scalar_lea.vmem [#allocation11], %s353
        %p355 = pneg %p213
        %p356 = pneg %p210
        %s357 = sand.u32 %s38, 1
        %s358 = scalar_lea.sflag [#allocation12], %s357
        %s359 = sand.u32 %s200, 1
        %s360 = scalar_lea.vmem [#allocation13], %s359
        %v361 = vld [vmem:[%s299] sm:$0xff]
        %vm362 = vcmask 261120
        %v363 = vsel %vm362, %v361, 0.0
        %v364 = vrot.slane %v363, 4
        %v365 = vadd.f32 %v363, %v364
        %v366 = vrot.slane %v365, 2
        %v367 = vadd.f32 %v365, %v366
        %v368 = vrot.slane %v367, 1
        %v369 = vadd.f32 %v367, %v368
        %v370 = vrcp.pop 8.0
        %v371 = vmul.f32 8.0, %v370
        %v372 = vsub.f32 1.0, %v371
        %v373 = vmul.f32 %v370, %v372
        %v374 = vadd.f32 %v370, %v373
        %vm375 = vweird.f32 %v370
        %v376 = vsel %vm375, %v370, %v374
        %v377 = vmul.f32 %v369, %v376
        %v378 = vsub.f32 %v361, %v377
        %v379 = vmul.f32 %v378, %v378
        %v380 = vsel %vm362, %v379, 0.0
        %v381 = vrot.slane %v380, 4
        %v382 = vadd.f32 %v380, %v381
        %v383 = vrot.slane %v382, 2
        %v384 = vadd.f32 %v382, %v383
        %v385 = vrot.slane %v384, 1
        %v386 = vadd.f32 %v384, %v385
        %v387 = vmul.f32 %v386, %v376
        %s388 = sld [smem:[#allocation3 + %s42]]
        %v389 = vstv %s388
        %v390 = vadd.f32 %v387, %v389
        %v391 = vrsqrt.pop %v390
        %v392 = vmul.f32 %v391, %v390
        %v393 = vmul.f32 %v392, %v391
        %v394 = vmul.f32 0.5, %v393
        %v395 = vsub.f32 1.5, %v394
        %v396 = vmul.f32 %v391, %v395
        %vm397 = vweird.f32 %v390
        %vm398 = vweird.f32 %v391
        %vm399 = vmor %vm397, %vm398
        %v400 = vsel %vm399, %v391, %v396
        %v401 = vld [vmem:[%s308] sm:$0x1]
        %v402 = vmul.f32 %v400, %v401
        %v403 = vperm.slane %v402, 0
        %v404 = vmul.f32 %v378, %v403
        %v405 = vld [vmem:[%s317] sm:$0x1]
        %v407 = vperm.slane %v405, 0
        %v409 = vadd.f32 %v404, %v407
        %410 = vst.msk [vmem:[%s348] sm:$0xff] %vm362, %v409
        %vm411 = vcmask 253952
        %412 = vst.msk [vmem:[%s354] sm:$0x1] %vm411, %v377
        %v413 = vmul.f32 %v387, 1.1428572
        %414 = vst.msk [vmem:[%s360] sm:$0x1] %vm411, %v413
        %s415 = sand.u32 %s144, 1
        %s416 = scalar_lea.sflag [#allocation6], %s415
        %s417 = sand.u32 %s144, 1
        %s418 = smul.addr %s417, 8
        %s419 = scalar_lea.vmem [#allocation10], %s418
        %s420 = sand.u32 %s38, 1
        %s421 = scalar_lea.sflag [#allocation12], %s420
        %s422 = sand.u32 %s172, 1
        %s423 = scalar_lea.vmem [#allocation11], %s422
        %s424 = sand.u32 %s38, 1
        %s425 = scalar_lea.sflag [#allocation12], %s424
        %s426 = sand.u32 %s200, 1
        %s427 = scalar_lea.vmem [#allocation13], %s426
        // Predicated region
        $region45: #{tpu_custom_call.1} parent=31 // pred_check
          %p428 = pneg %p154
        $region46: #{tpu_custom_call.1} parent=31 // pred_check_branch
          %430 = sbr.rel (%p428) target = $region48
        $region47: #{tpu_custom_call.1} parent=31 // pred_region
          %432 = vsyncadd %s416, 0
          %s433 = sadd.s32 %s43, %s42
          %s434 = smul.addr %s433, 8
          %s435 = scalar_lea.hbm %s4, %s434
          %s437 = sshll.u32 %s419, 4
          %s438 = int_to_ptr.vmem [resolvable:$true] %s437
          %s439 = sshll.u32 %s435, 4
          %s440 = int_to_ptr.hbm [resolvable:$true] %s439
          %442 = dma.vmem_to_hbm [thread:$0]  %s438, 128, %s440, %s416
        $region48: #{tpu_custom_call.1} parent=31 // pred_fallthru
          _
        // Predicated region
        $region49: #{tpu_custom_call.1} parent=31 // pred_check
          %p443 = pneg %p182
        $region50: #{tpu_custom_call.1} parent=31 // pred_check_branch
          %445 = sbr.rel (%p443) target = $region52
        $region51: #{tpu_custom_call.1} parent=31 // pred_region
          %447 = vsyncadd %s421, 0
          %s448 = sadd.s32 %s43, %s42
          %s449 = scalar_lea.hbm %s5, %s448
          %s451 = sshll.u32 %s423, 4
          %s452 = int_to_ptr.vmem [resolvable:$true] %s451
          %s453 = sshll.u32 %s449, 4
          %s454 = int_to_ptr.hbm [resolvable:$true] %s453
          %456 = dma.vmem_to_hbm [thread:$0]  %s452, 16, %s454, %s421
        $region52: #{tpu_custom_call.1} parent=31 // pred_fallthru
          _
        // Predicated region
        $region53: #{tpu_custom_call.1} parent=31 // pred_check
          %p457 = pneg %p210
        $region54: #{tpu_custom_call.1} parent=31 // pred_check_branch
          %459 = sbr.rel (%p457) target = $region56
        $region55: #{tpu_custom_call.1} parent=31 // pred_region
          %461 = vsyncadd %s425, 0
          %s462 = sadd.s32 %s43, %s42
          %s463 = scalar_lea.hbm %s6, %s462
          %s465 = sshll.u32 %s427, 4
          %s466 = int_to_ptr.vmem [resolvable:$true] %s465
          %s467 = sshll.u32 %s463, 4
          %s468 = int_to_ptr.hbm [resolvable:$true] %s467
          %470 = dma.vmem_to_hbm [thread:$0]  %s466, 16, %s468, %s425
        $region56: #{tpu_custom_call.1} parent=31 // pred_fallthru
          _
      $region32: #{tpu_custom_call.1} parent=5 // pred_fallthru
        _
      %p471 = scmp.le.s32.totalorder 2, %s33
      // Predicated region
      $region57: #{tpu_custom_call.1} parent=5 // pred_check
        %p472 = pneg %p471
      $region58: #{tpu_custom_call.1} parent=5 // pred_check_branch
        %474 = sbr.rel (%p472) target = $region60
      $region59: #{tpu_custom_call.1} parent=5 // pred_region
        %s475 = ssub.s32 %s33, 2
        // Predicated region
        $region61: #{tpu_custom_call.1} parent=59 // pred_check
          %p476 = pneg %p160
        $region62: #{tpu_custom_call.1} parent=59 // pred_check_branch
          %478 = sbr.rel (%p476) target = $region64
        $region63: #{tpu_custom_call.1} parent=59 // pred_region
          %s479 = sand.u32 %s145, 1
          %s480 = scalar_lea.sflag [#allocation6], %s479
          %s481 = sand.u32 %s145, 1
          %s482 = smul.addr %s481, 8
          %s483 = scalar_lea.vmem [#allocation10], %s482
          %485 = dma.done %s480, 128
        $region64: #{tpu_custom_call.1} parent=59 // pred_fallthru
          _
        // Predicated region
        $region65: #{tpu_custom_call.1} parent=59 // pred_check
          %p486 = pneg %p188
        $region66: #{tpu_custom_call.1} parent=59 // pred_check_branch
          %488 = sbr.rel (%p486) target = $region68
        $region67: #{tpu_custom_call.1} parent=59 // pred_region
          %s489 = sand.u32 %s39, 1
          %s490 = scalar_lea.sflag [#allocation12], %s489
          %s491 = sand.u32 %s173, 1
          %s492 = scalar_lea.vmem [#allocation11], %s491
          %494 = dma.done %s490, 16
        $region68: #{tpu_custom_call.1} parent=59 // pred_fallthru
          _
        // Predicated region
        $region69: #{tpu_custom_call.1} parent=59 // pred_check
          %p495 = pneg %p216
        $region70: #{tpu_custom_call.1} parent=59 // pred_check_branch
          %497 = sbr.rel (%p495) target = $region72
        $region71: #{tpu_custom_call.1} parent=59 // pred_region
          %s498 = sand.u32 %s39, 1
          %s499 = scalar_lea.sflag [#allocation12], %s498
          %s500 = sand.u32 %s201, 1
          %s501 = scalar_lea.vmem [#allocation13], %s500
          %503 = dma.done %s499, 16
        $region72: #{tpu_custom_call.1} parent=59 // pred_fallthru
          _
      $region60: #{tpu_custom_call.1} parent=5 // pred_fallthru
        _
    $region6: #{tpu_custom_call.1} parent=1 // loop_footer
      %s37 = sadd.s32 1, %s33
    $region7: #{tpu_custom_call.1} parent=1 // loop_footer_branch
      %32 = sbr.rel target = $region3
    $region8: #{tpu_custom_call.1} parent=1 // loop_exit
      _
    %504 = vsyncpa [#allocation5], 1
    %s505 = scalar_lea.sflag [#allocation5], 1
    %506 = vsyncpa %s505, 1
    %507 = vsyncpa [#allocation8], 1
    %s508 = scalar_lea.sflag [#allocation8], 1
    %509 = vsyncpa %s508, 1
    %510 = vsyncpa [#allocation6], 1
    %s511 = scalar_lea.sflag [#allocation6], 1
    %512 = vsyncpa %s511, 1
    %513 = vsyncpa [#allocation12], 1
    %s514 = scalar_lea.sflag [#allocation12], 1
    %515 = vsyncpa %s514, 1

</llo_original>
